<compile_context>
chip_gen: v5e
topology: v5e:2x2
jax: 0.10.0
libtpu: 0.0.40
codegen_flags: <defaults>
</compile_context>

<pallas_src>
import functools

import jax
import jax.numpy as jnp
from jax.experimental import pallas as pl
from jax.experimental.pallas import tpu as pltpu


def _round_up(x, m):
    return ((x + m - 1) // m) * m


def _tpu_vmem_capacity_bytes():
    """Physical per-core VMEM, with a conservative (v7x-safe) fallback."""
    try:
        info = pltpu.get_tpu_info()
        cap = getattr(info, "vmem_capacity_bytes", None)
        if cap:
            return int(cap)
    except Exception:
        pass
    return 64 << 20


def mlp_kernel(x_ref, w1_ref, b1_ref, w2_ref, b2_ref, o_ref, acc_ref, hid_ref):
    """One (tm, tn) output tile; accumulates over hidden blocks (grid axis 2).

    hid_ref: (Hp//th, tm, th) staged hidden activation for the current batch
    tile, filled only while j == 0 and reused for every j > 0.
    """
    j = pl.program_id(1)
    h_idx = pl.program_id(2)

    @pl.when(h_idx == 0)
    def _():
        # Seed the accumulator with the second bias so the finalize is a cast.
        acc_ref[...] = jnp.broadcast_to(b2_ref[...], acc_ref.shape)

    @pl.when(j == 0)
    def _():
        # First GEMM for this hidden block: computed once per (i, h) and
        # staged in VMEM; never recomputed for the remaining output tiles.
        hblk = jnp.dot(x_ref[...], w1_ref[...], preferred_element_type=jnp.float32)
        hblk = jnp.maximum(hblk + b1_ref[...], 0.0)
        hid_ref[h_idx] = hblk.astype(hid_ref.dtype)

    # Second GEMM partial: (tm, th) @ (th, tn), accumulated in f32 scratch.
    acc_ref[...] += jnp.dot(
        hid_ref[h_idx], w2_ref[...], preferred_element_type=jnp.float32
    )

    @pl.when(h_idx == pl.num_programs(2) - 1)
    def _():
        o_ref[...] = acc_ref[...].astype(o_ref.dtype)


@functools.partial(
    jax.jit, static_argnames=("tm", "tn", "th", "compute_dtype", "out_dtype")
)
def mlp_forward(x, w1, b1, w2, b2, *, tm=None, tn=256, th=None,
                compute_dtype=jnp.bfloat16, out_dtype=None):
    M, K = x.shape
    Kw, H = w1.shape
    Hw, N = w2.shape
    assert K == Kw and H == Hw, "weight shapes do not match input/hidden dims"
    out_dtype = out_dtype or x.dtype
    cdt = compute_dtype
    bpe = jnp.dtype(cdt).itemsize
    obe = jnp.dtype(out_dtype).itemsize

    # --- generation-aware defaults -----------------------------------------
    vmem_cap = _tpu_vmem_capacity_bytes()
    big_vmem = vmem_cap >= (128 << 20)            # v5e / v6e
    if tm is None:
        tm = 512 if big_vmem else 256             # bigger tm => higher flop/byte
    if th is None:
        th = 1024 if big_vmem else 512
    # Leave headroom for compiler-internal scratch; never hand out all of VMEM.
    vmem_ceiling = (100 << 20) if big_vmem else (48 << 20)

    # Clamp tiles to the (aligned) problem size so toy shapes don't over-pad.
    tm = min(tm, _round_up(M, 8))
    tn = min(tn, _round_up(N, 128))
    th = min(th, _round_up(H, 128))
    Kp = _round_up(K, 128)

    # --- VMEM fit check ------------------------------------------------------
    def _budget(tm_, tn_, th_, Hp_):
        # Double-buffered pipeline tiles (x's block index only changes with i,
        # but we conservatively budget both buffers) + persistent scratch.
        return (2 * (tm_ * Kp * bpe          # x tile
                     + Kp * th_ * bpe        # w1 tile
                     + th_ * 4               # b1 tile (f32)
                     + th_ * tn_ * bpe       # w2 tile
                     + tn_ * 4               # b2 tile (f32)
                     + tm_ * tn_ * obe)      # out tile
                + tm_ * tn_ * 4              # f32 accumulator scratch
                + tm_ * Hp_ * bpe)           # staged hidden activation scratch

    Hp = _round_up(H, th)
    while _budget(tm, tn, th, Hp) > vmem_ceiling and th > 256:
        th = max(256, th // 2)
        Hp = _round_up(H, th)
    while _budget(tm, tn, th, Hp) > vmem_ceiling and tm > 128:
        tm = max(128, _round_up(tm // 2, 8))
    while _budget(tm, tn, th, Hp) > vmem_ceiling and tn > 128:
        tn = max(128, tn // 2)
    # TODO(synk): for K or H so large that even minimal tiles exceed the VMEM
    # ceiling, add a K grid axis (and/or drop the hidden staging) instead of
    # relying on the clamp below.

    Mp = _round_up(M, tm)
    Np = _round_up(N, tn)
    Hp = _round_up(H, th)

    budget = _budget(tm, tn, th, Hp)
    if budget <= vmem_ceiling:
        vmem_limit = min(max(budget + (8 << 20), 32 << 20), vmem_ceiling)
    else:
        # Could not shrink enough (huge K/H); grant what we legitimately can.
        vmem_limit = max(budget, vmem_cap - (8 << 20))

    # --- padding (exact: padded hidden cols give relu(0 + 0) = 0) ------------
    b1 = jnp.reshape(b1, (1, H)).astype(jnp.float32)
    b2 = jnp.reshape(b2, (1, N)).astype(jnp.float32)
    xp = jnp.pad(x.astype(cdt), ((0, Mp - M), (0, Kp - K)))
    w1p = jnp.pad(w1.astype(cdt), ((0, Kp - K), (0, Hp - H)))
    b1p = jnp.pad(b1, ((0, 0), (0, Hp - H)))
    w2p = jnp.pad(w2.astype(cdt), ((0, Hp - H), (0, Np - N)))
    b2p = jnp.pad(b2, ((0, 0), (0, Np - N)))

    grid = (Mp // tm, Np // tn, Hp // th)
    n_i = Mp // tm

    # w1/b1 are only read while j == 0; for j > 0 pin the block index to (0, 0)
    # so consecutive grid steps keep the same index and Pallas skips the DMA.
    def w1_map(i, j, h):
        return (0, jnp.where(j == 0, h, 0))

    def b1_map(i, j, h):
        return (0, jnp.where(j == 0, h, 0))

    flops = 2 * Mp * Kp * Hp + 2 * Mp * Hp * Np
    bytes_accessed = (
        Mp * Kp * bpe                 # x (read once per batch tile)
        + n_i * Kp * Hp * bpe         # w1 (re-read per batch tile)
        + n_i * Hp * 4                # b1
        + n_i * Hp * Np * bpe         # w2 (re-read per batch tile)
        + n_i * Np * 4                # b2
        + Mp * Np * obe               # out
    )

    out_padded = pl.pallas_call(
        mlp_kernel,
        out_shape=jax.ShapeDtypeStruct((Mp, Np), out_dtype),
        grid_spec=pltpu.PrefetchScalarGridSpec(
            num_scalar_prefetch=0,
            grid=grid,
            in_specs=[
                # x tile: block index only changes with i (resident across j, h).
                pl.BlockSpec((tm, Kp), lambda i, j, h: (i, 0)),
                pl.BlockSpec((Kp, th), w1_map),
                pl.BlockSpec((1, th), b1_map),
                pl.BlockSpec((th, tn), lambda i, j, h: (h, j)),
                pl.BlockSpec((1, tn), lambda i, j, h: (0, j)),
            ],
            # Same output block for every h -> VMEM-resident accumulator target.
            out_specs=pl.BlockSpec((tm, tn), lambda i, j, h: (i, j)),
            scratch_shapes=[
                pltpu.VMEM((tm, tn), jnp.float32),          # f32 accumulator
                pltpu.VMEM((Hp // th, tm, th), cdt),        # staged hidden act
            ],
        ),
        # j must be "arbitrary": j > 0 depends on the hidden activation staged
        # at j == 0 (same core's scratch). On v7x the megacore split rides on i.
        compiler_params=pltpu.CompilerParams(
            dimension_semantics=("parallel", "arbitrary", "arbitrary"),
            vmem_limit_bytes=int(vmem_limit),
        ),
        cost_estimate=pl.CostEstimate(
            flops=int(flops),
            transcendentals=0,
            bytes_accessed=int(bytes_accessed),
        ),
    )(xp, w1p, b1p, w2p, b2p)

    return out_padded[:M, :N]


def init_linear(key, fan_in, fan_out, dtype=jnp.float32):
    # Mirrors torch.nn.Linear default init: U(-1/sqrt(fan_in), 1/sqrt(fan_in)).
    kw, kb = jax.random.split(key)
    bound = 1.0 / (fan_in ** 0.5)
    w = jax.random.uniform(kw, (fan_in, fan_out), dtype, minval=-bound, maxval=bound)
    b = jax.random.uniform(kb, (1, fan_out), dtype, minval=-bound, maxval=bound)
    return w, b


if __name__ == "__main__":
    input_dims, hidden_dims, output_dims = 16, 32, 8
    batch = 4

    key = jax.random.PRNGKey(0)
    k_x, k_l1, k_l2 = jax.random.split(key, 3)

    x = jax.random.normal(k_x, (batch, input_dims), jnp.float32)
    w1, b1 = init_linear(k_l1, input_dims, hidden_dims)
    w2, b2 = init_linear(k_l2, hidden_dims, output_dims)

    # Reference in plain JAX (same math as the PyTorch module).
    ref = jnp.maximum(x @ w1 + b1, 0.0) @ w2 + b2

    # f32 compute path: tight numerical check.
    out_f32 = mlp_forward(x, w1, b1, w2, b2, compute_dtype=jnp.float32)
    jax.block_until_ready(out_f32)
    assert out_f32.shape == (batch, output_dims)
    assert jnp.allclose(out_f32, ref, atol=1e-5, rtol=1e-5)

    # bf16 compute path (production default): looser tolerance vs f32 reference.
    out_bf16 = mlp_forward(x, w1, b1, w2, b2)
    jax.block_until_ready(out_bf16)
    assert out_bf16.shape == (batch, output_dims)
    assert jnp.allclose(out_bf16, ref, atol=5e-2, rtol=5e-2)

    print("KERNEL_OK")
</pallas_src>

<mosaic_0001>
module attributes {stable_mosaic.version = 11 : i64} {
  func.func @mlp_kernel(%arg0: i32, %arg1: i32, %arg2: i32, %arg3: memref<8x128xf32, #tpu.memory_space<vmem>>, %arg4: memref<128x128xf32, #tpu.memory_space<vmem>>, %arg5: memref<1x128xf32, #tpu.memory_space<vmem>>, %arg6: memref<128x128xf32, #tpu.memory_space<vmem>>, %arg7: memref<1x128xf32, #tpu.memory_space<vmem>>, %arg8: memref<8x128xf32, #tpu.memory_space<vmem>>, %arg9: memref<8x128xf32, #tpu.memory_space<vmem>>, %arg10: memref<1x8x128xf32, #tpu.memory_space<vmem>>) attributes {dimension_semantics = [#tpu.dimension_semantics<parallel>, #tpu.dimension_semantics<arbitrary>, #tpu.dimension_semantics<arbitrary>], iteration_bounds = array<i64: 1, 1, 1>, scalar_prefetch = 0 : i64, scratch_operands = 2 : i64, tpu.core_type = #tpu.core_type<tc>, window_params = [{transform_indices = @transform_0, window_bounds = array<i64: 8, 128>}, {transform_indices = @transform_1, window_bounds = array<i64: 128, 128>}, {transform_indices = @transform_2, window_bounds = array<i64: 1, 128>}, {transform_indices = @transform_3, window_bounds = array<i64: 128, 128>}, {transform_indices = @transform_4, window_bounds = array<i64: 1, 128>}, {transform_indices = @transform_5, window_bounds = array<i64: 8, 128>}]} {
    %c0_i32 = arith.constant 0 : i32
    %0 = arith.cmpi eq, %arg2, %c0_i32 : i32
    %1 = arith.extui %0 : i1 to i32
    %c0_i32_0 = arith.constant 0 : i32
    %2 = arith.cmpi ne, %1, %c0_i32_0 : i32
    scf.if %2 {
      %c0_12 = arith.constant 0 : index
      %c0_13 = arith.constant 0 : index
      %17 = vector.load %arg7[%c0_12, %c0_13] : memref<1x128xf32, #tpu.memory_space<vmem>>, vector<1x128xf32>
      %18 = vector.shape_cast %17 : vector<1x128xf32> to vector<1x128xf32>
      %19 = vector.broadcast %18 : vector<1x128xf32> to vector<8x128xf32>
      %c0_14 = arith.constant 0 : index
      %c0_15 = arith.constant 0 : index
      %20 = vector.load %arg9[%c0_14, %c0_15] : memref<8x128xf32, #tpu.memory_space<vmem>>, vector<8x128xf32>
      tpu.vector_store %arg9[%c0_14, %c0_15], %19 {strides = array<i32>} : memref<8x128xf32, #tpu.memory_space<vmem>>, vector<8x128xf32>,
    } else {
    }
    %c0_i32_1 = arith.constant 0 : i32
    %3 = arith.cmpi eq, %arg1, %c0_i32_1 : i32
    %4 = arith.extui %3 : i1 to i32
    %c0_i32_2 = arith.constant 0 : i32
    %5 = arith.cmpi ne, %4, %c0_i32_2 : i32
    scf.if %5 {
      %c0_12 = arith.constant 0 : index
      %c0_13 = arith.constant 0 : index
      %17 = vector.load %arg3[%c0_12, %c0_13] : memref<8x128xf32, #tpu.memory_space<vmem>>, vector<8x128xf32>
      %c0_14 = arith.constant 0 : index
      %c0_15 = arith.constant 0 : index
      %18 = vector.load %arg4[%c0_14, %c0_15] : memref<128x128xf32, #tpu.memory_space<vmem>>, vector<128x128xf32>
      %cst_16 = arith.constant dense<0.000000e+00> : vector<8x128xf32>
      %19 = tpu.matmul %17, %18, %cst_16 {dimension_numbers = #tpu.dot_dimension_numbers<[1], [0], [0], [1], [0, 0, 1, 1], [], []>} : vector<8x128xf32>, vector<128x128xf32>, vector<8x128xf32> -> vector<8x128xf32>
      %c0_17 = arith.constant 0 : index
      %c0_18 = arith.constant 0 : index
      %20 = vector.load %arg5[%c0_17, %c0_18] : memref<1x128xf32, #tpu.memory_space<vmem>>, vector<1x128xf32>
      %21 = vector.broadcast %20 : vector<1x128xf32> to vector<8x128xf32>
      %22 = arith.addf %19, %21 : vector<8x128xf32>
      %cst_19 = arith.constant 0.000000e+00 : f32
      %23 = vector.broadcast %cst_19 : f32 to vector<8x128xf32>
      %24 = arith.maximumf %22, %23 : vector<8x128xf32>
      %25 = arith.index_cast %arg2 : i32 to index
      %c0_20 = arith.constant 0 : index
      %c0_21 = arith.constant 0 : index
      %26 = vector.load %arg10[%25, %c0_20, %c0_21] : memref<1x8x128xf32, #tpu.memory_space<vmem>>, vector<1x8x128xf32>
      %27 = vector.shape_cast %26 : vector<1x8x128xf32> to vector<8x128xf32>
      %28 = vector.shape_cast %24 : vector<8x128xf32> to vector<1x8x128xf32>
      tpu.vector_store %arg10[%25, %c0_20, %c0_21], %28 {strides = array<i32>} : memref<1x8x128xf32, #tpu.memory_space<vmem>>, vector<1x8x128xf32>,
    } else {
    }
    %c0 = arith.constant 0 : index
    %c0_3 = arith.constant 0 : index
    %6 = vector.load %arg9[%c0, %c0_3] : memref<8x128xf32, #tpu.memory_space<vmem>>, vector<8x128xf32>
    %7 = arith.index_cast %arg2 : i32 to index
    %c0_4 = arith.constant 0 : index
    %c0_5 = arith.constant 0 : index
    %8 = vector.load %arg10[%7, %c0_4, %c0_5] : memref<1x8x128xf32, #tpu.memory_space<vmem>>, vector<1x8x128xf32>
    %9 = vector.shape_cast %8 : vector<1x8x128xf32> to vector<8x128xf32>
    %c0_6 = arith.constant 0 : index
    %c0_7 = arith.constant 0 : index
    %10 = vector.load %arg6[%c0_6, %c0_7] : memref<128x128xf32, #tpu.memory_space<vmem>>, vector<128x128xf32>
    %cst = arith.constant dense<0.000000e+00> : vector<8x128xf32>
    %11 = tpu.matmul %9, %10, %cst {dimension_numbers = #tpu.dot_dimension_numbers<[1], [0], [0], [1], [0, 0, 1, 1], [], []>} : vector<8x128xf32>, vector<128x128xf32>, vector<8x128xf32> -> vector<8x128xf32>
    %12 = arith.addf %6, %11 : vector<8x128xf32>
    %c0_8 = arith.constant 0 : index
    %c0_9 = arith.constant 0 : index
    %13 = vector.load %arg9[%c0_8, %c0_9] : memref<8x128xf32, #tpu.memory_space<vmem>>, vector<8x128xf32>
    tpu.vector_store %arg9[%c0_8, %c0_9], %12 {strides = array<i32>} : memref<8x128xf32, #tpu.memory_space<vmem>>, vector<8x128xf32>,
    %c0_i32_10 = arith.constant 0 : i32
    %14 = arith.cmpi eq, %arg2, %c0_i32_10 : i32
    %15 = arith.extui %14 : i1 to i32
    %c0_i32_11 = arith.constant 0 : i32
    %16 = arith.cmpi ne, %15, %c0_i32_11 : i32
    scf.if %16 {
      %c0_12 = arith.constant 0 : index
      %c0_13 = arith.constant 0 : index
      %17 = vector.load %arg9[%c0_12, %c0_13] : memref<8x128xf32, #tpu.memory_space<vmem>>, vector<8x128xf32>
      %c0_14 = arith.constant 0 : index
      %c0_15 = arith.constant 0 : index
      %18 = vector.load %arg8[%c0_14, %c0_15] : memref<8x128xf32, #tpu.memory_space<vmem>>, vector<8x128xf32>
      tpu.vector_store %arg8[%c0_14, %c0_15], %17 {strides = array<i32>} : memref<8x128xf32, #tpu.memory_space<vmem>>, vector<8x128xf32>,
    } else {
    }
    return
  }
  func.func @transform_0(%arg0: i32, %arg1: i32, %arg2: i32) -> (i32, i32) {
    %c0_i32 = arith.constant 0 : i32
    %c0_i32_0 = arith.constant 0 : i32
    return %arg0, %c0_i32 : i32, i32
  }
  func.func @transform_1(%arg0: i32, %arg1: i32, %arg2: i32) -> (i32, i32) {
    %c0_i32 = arith.constant 0 : i32
    %0 = arith.cmpi eq, %arg1, %c0_i32 : i32
    %c0_i32_0 = arith.constant 0 : i32
    %1 = arith.select %0, %arg2, %c0_i32_0 : i32
    %c0_i32_1 = arith.constant 0 : i32
    %c0_i32_2 = arith.constant 0 : i32
    return %c0_i32_1, %1 : i32, i32
  }
  func.func @transform_2(%arg0: i32, %arg1: i32, %arg2: i32) -> (i32, i32) {
    %c0_i32 = arith.constant 0 : i32
    %0 = arith.cmpi eq, %arg1, %c0_i32 : i32
    %c0_i32_0 = arith.constant 0 : i32
    %1 = arith.select %0, %arg2, %c0_i32_0 : i32
    %c0_i32_1 = arith.constant 0 : i32
    %c0_i32_2 = arith.constant 0 : i32
    return %c0_i32_1, %1 : i32, i32
  }
  func.func @transform_3(%arg0: i32, %arg1: i32, %arg2: i32) -> (i32, i32) {
    %c0_i32 = arith.constant 0 : i32
    return %arg2, %arg1 : i32, i32
  }
  func.func @transform_4(%arg0: i32, %arg1: i32, %arg2: i32) -> (i32, i32) {
    %c0_i32 = arith.constant 0 : i32
    %c0_i32_0 = arith.constant 0 : i32
    return %c0_i32, %arg1 : i32, i32
  }
  func.func @transform_5(%arg0: i32, %arg1: i32, %arg2: i32) -> (i32, i32) {
    %c0_i32 = arith.constant 0 : i32
    return %arg0, %arg1 : i32, i32
  }
}

</mosaic_0001>

<llo_original>
// kernel: mlp_forward.1
$region0: #{mlp_forward.1}
  #allocation0 [shape = 'u32[]', space=smem, size = 0x4, offset = 0x4, fixed_abs, tag = 'smem constant byte address 0x4 - core index']
  #allocation1 [shape = 'u32[72,128]{1,0:T(1,128)}', space=vmem, size = 0x9000, scoped, tag = 'internal scratch']
  #allocation2 [shape = 'f32[8,128]{1,0:T(8,128)}', space=vmem, size = 0x1000, scoped, tag = 'scratch operand']
  #allocation3 [shape = 'f32[1,8,128]{2,1,0:T(8,128)}', space=vmem, size = 0x1000, scoped, tag = 'scratch operand']
  %s0 = inlined_call_operand.vmem [shape: f32[8,128], index: 0, kind: input, shape index: {}]
  %s1 = inlined_call_operand.vmem [shape: f32[128,128], index: 1, kind: input, shape index: {}]
  %s2 = inlined_call_operand.vmem [shape: f32[1,128], index: 2, kind: input, shape index: {}]
  %s3 = inlined_call_operand.vmem [shape: f32[128,128], index: 3, kind: input, shape index: {}]
  %s4 = inlined_call_operand.vmem [shape: f32[1,128], index: 4, kind: input, shape index: {}]
  %s5 = inlined_call_operand.vmem [shape: f32[8,128], index: 5, kind: output, shape index: {}]
  %s6 = sld [smem:[#allocation0]]
  $region42: #{mlp_forward.1} parent=0
    _
  %s8 = ssub.s32 1, %s6
  %s9 = scalar_select 0, %s8, %s6
  // Predicated region
  $region2: #{mlp_forward.1} parent=0 // pred_check
    _
  $region3: #{mlp_forward.1} parent=0 // pred_check_branch
    %11 = sbr.rel (0) target = $region5
  $region4: #{mlp_forward.1} parent=0 // pred_region
    _
  $region5: #{mlp_forward.1} parent=0 // pred_fallthru
    _
  // Predicated region
  $region6: #{mlp_forward.1} parent=0 // pred_check
    _
  $region7: #{mlp_forward.1} parent=0 // pred_check_branch
    %13 = sbr.rel (0) target = $region9
  $region8: #{mlp_forward.1} parent=0 // pred_region
    %p14 = scmp.eq.s32.totalorder 0, 0
    %s15 = scalar_select %p14, 0, 0
    %p16 = scmp.lt.s32.totalorder %s15, 0
    %s17 = scalar_select %p16, %s15, 0
    %s18 = smul.addr %s17, 8
    %s19 = scalar_lea.vmem %s1, %s18
    %p20 = scmp.eq.s32.totalorder 0, 0
    %s21 = scalar_select %p20, 0, 0
  $region9: #{mlp_forward.1} parent=0 // pred_fallthru
    _
  // Predicated region
  $region10: #{mlp_forward.1} parent=0 // pred_check
    _
  $region11: #{mlp_forward.1} parent=0 // pred_check_branch
    %23 = sbr.rel (0) target = $region13
  $region12: #{mlp_forward.1} parent=0 // pred_region
    %p24 = scmp.eq.s32.totalorder 0, 0
    %s25 = scalar_select %p24, 0, 0
    %p26 = scmp.lt.s32.totalorder %s25, 0
    %s27 = scalar_select %p26, %s25, 0
    %s28 = scalar_lea.vmem %s2, %s27
    %p29 = scmp.eq.s32.totalorder 0, 0
    %s30 = scalar_select %p29, 0, 0
  $region13: #{mlp_forward.1} parent=0 // pred_fallthru
    _
  // Predicated region
  $region14: #{mlp_forward.1} parent=0 // pred_check
    _
  $region15: #{mlp_forward.1} parent=0 // pred_check_branch
    %32 = sbr.rel (0) target = $region17
  $region16: #{mlp_forward.1} parent=0 // pred_region
    _
  $region17: #{mlp_forward.1} parent=0 // pred_fallthru
    _
  // Predicated region
  $region18: #{mlp_forward.1} parent=0 // pred_check
    _
  $region19: #{mlp_forward.1} parent=0 // pred_check_branch
    %34 = sbr.rel (0) target = $region21
  $region20: #{mlp_forward.1} parent=0 // pred_region
    _
  $region21: #{mlp_forward.1} parent=0 // pred_fallthru
    _
  %p35 = scmp.eq.s32.totalorder 0, 0
  %s36 = scalar_select %p35, 0, 0
  %p37 = scmp.lt.s32.totalorder %s36, 0
  %s38 = scalar_select %p37, %s36, 0
  %s39 = smul.addr %s38, 8
  %s40 = scalar_lea.vmem %s1, %s39
  %p41 = scmp.eq.s32.totalorder 0, 0
  %s42 = scalar_select %p41, 0, 0
  %p43 = scmp.lt.s32.totalorder %s42, 0
  %s44 = scalar_select %p43, %s42, 0
  %s45 = scalar_lea.vmem %s2, %s44
  %p46 = scmp.eq.s32.totalorder 0, 0
  %s47 = scalar_select %p46, 0, 0
  %p48 = scmp.lt.s32.totalorder %s47, 0
  %s49 = scalar_select %p48, %s47, 0
  %s50 = smul.addr %s49, 8
  %s51 = scalar_lea.vmem %s1, %s50
  %p52 = scmp.eq.s32.totalorder 0, 0
  %s53 = scalar_select %p52, 0, 0
  %p54 = scmp.eq.s32.totalorder 0, 0
  %s55 = scalar_select %p54, 0, 0
  %p56 = scmp.lt.s32.totalorder %s55, 0
  %s57 = scalar_select %p56, %s55, 0
  %s58 = scalar_lea.vmem %s2, %s57
  %p59 = scmp.eq.s32.totalorder 0, 0
  %s60 = scalar_select %p59, 0, 0
  %p61 = scmp.eq.s32.totalorder 0, 0
  // Predicated region
  $region22: #{mlp_forward.1} parent=0 // pred_check
    %p62 = pneg %p61
  $region23: #{mlp_forward.1} parent=0 // pred_check_branch
    %64 = sbr.rel (%p62) target = $region25
  $region24: #{mlp_forward.1} parent=0 // pred_region
    %v65 = vld [vmem:[%s4] sm:$0x1]
    %v67 = vperm.slane %v65, 0
    %69 = vst [vmem:[#allocation2] sm:$0xff] %v67
  $region25: #{mlp_forward.1} parent=0 // pred_fallthru
    _
  %p70 = scmp.eq.s32.totalorder 0, 0
  // Predicated region
  $region26: #{mlp_forward.1} parent=0 // pred_check
    %p71 = pneg %p70
  $region27: #{mlp_forward.1} parent=0 // pred_check_branch
    %73 = sbr.rel (%p71) target = $region29
  $region28: #{mlp_forward.1} parent=0 // pred_region
    %v74 = vld [vmem:[%s0] sm:$0xff]
    %v75 = vld [vmem:[%s51] sm:$0xff]
    %v76 = vld [vmem:[%s51 + $0x8] sm:$0xff]
    %v77 = vld [vmem:[%s51 + $0x10] sm:$0xff]
    %v78 = vld [vmem:[%s51 + $0x18] sm:$0xff]
    %v79 = vld [vmem:[%s51 + $0x20] sm:$0xff]
    %v80 = vld [vmem:[%s51 + $0x28] sm:$0xff]
    %v81 = vld [vmem:[%s51 + $0x30] sm:$0xff]
    %v82 = vld [vmem:[%s51 + $0x38] sm:$0xff]
    %v83 = vld [vmem:[%s51 + $0x40] sm:$0xff]
    %v84 = vld [vmem:[%s51 + $0x48] sm:$0xff]
    %v85 = vld [vmem:[%s51 + $0x50] sm:$0xff]
    %v86 = vld [vmem:[%s51 + $0x58] sm:$0xff]
    %v87 = vld [vmem:[%s51 + $0x60] sm:$0xff]
    %v88 = vld [vmem:[%s51 + $0x68] sm:$0xff]
    %v89 = vld [vmem:[%s51 + $0x70] sm:$0xff]
    %v90 = vld [vmem:[%s51 + $0x78] sm:$0xff]
    %v91 = vld [vmem:[%s58] sm:$0x1]
    %v93 = vperm.slane %v91, 0
    %95 = vmatpush.msra.mxu0 %v90
    %96 = vmatpush.msra.mxu0 %v89
    %97 = vmatpush.msra.mxu0 %v88
    %98 = vmatpush.msra.mxu0 %v87
    %99 = vmatpush.msra.mxu0 %v86
    %100 = vmatpush.msra.mxu0 %v85
    %101 = vmatpush.msra.mxu0 %v84
    %102 = vmatpush.msra.mxu0 %v83
    %103 = vmatpush.msra.mxu0 %v82
    %104 = vmatpush.msra.mxu0 %v81
    %105 = vmatpush.msra.mxu0 %v80
    %106 = vmatpush.msra.mxu0 %v79
    %107 = vmatpush.msra.mxu0 %v78
    %108 = vmatpush.msra.mxu0 %v77
    %109 = vmatpush.msra.mxu0 %v76
    %110 = vmatpush.msra.mxu0 %v75
    %111 = vmatmul.f32.gmra.mxu0 %v74
    %v112 = vpop.f32.mrf.mxu0
    %v113 = vadd.f32 %v93, %v112
    %114 = vdwg.mxu0
    %v115 = vmax.f32 %v113, 0.0
    %s116 = smul.u32 0, 8
    %s117 = scalar_lea.vmem [#allocation3], %s116
    %118 = vst [vmem:[%s117] sm:$0xff] %v115
  $region29: #{mlp_forward.1} parent=0 // pred_fallthru
    _
  %v119 = vld [vmem:[#allocation2] sm:$0xff]
  %s120 = smul.u32 0, 8
  %s121 = scalar_lea.vmem [#allocation3], %s120
  %v122 = vld [vmem:[%s121] sm:$0xff]
  %v123 = vld [vmem:[%s3] sm:$0xff]
  %v124 = vld [vmem:[%s3 + $0x8] sm:$0xff]
  %v125 = vld [vmem:[%s3 + $0x10] sm:$0xff]
  %v126 = vld [vmem:[%s3 + $0x18] sm:$0xff]
  %v127 = vld [vmem:[%s3 + $0x20] sm:$0xff]
  %v128 = vld [vmem:[%s3 + $0x28] sm:$0xff]
  %v129 = vld [vmem:[%s3 + $0x30] sm:$0xff]
  %v130 = vld [vmem:[%s3 + $0x38] sm:$0xff]
  %v131 = vld [vmem:[%s3 + $0x40] sm:$0xff]
  %v132 = vld [vmem:[%s3 + $0x48] sm:$0xff]
  %v133 = vld [vmem:[%s3 + $0x50] sm:$0xff]
  %v134 = vld [vmem:[%s3 + $0x58] sm:$0xff]
  %v135 = vld [vmem:[%s3 + $0x60] sm:$0xff]
  %v136 = vld [vmem:[%s3 + $0x68] sm:$0xff]
  %v137 = vld [vmem:[%s3 + $0x70] sm:$0xff]
  %v138 = vld [vmem:[%s3 + $0x78] sm:$0xff]
  %139 = vmatpush.msra.mxu0 %v138
  %140 = vmatpush.msra.mxu0 %v137
  %141 = vmatpush.msra.mxu0 %v136
  %142 = vmatpush.msra.mxu0 %v135
  %143 = vmatpush.msra.mxu0 %v134
  %144 = vmatpush.msra.mxu0 %v133
  %145 = vmatpush.msra.mxu0 %v132
  %146 = vmatpush.msra.mxu0 %v131
  %147 = vmatpush.msra.mxu0 %v130
  %148 = vmatpush.msra.mxu0 %v129
  %149 = vmatpush.msra.mxu0 %v128
  %150 = vmatpush.msra.mxu0 %v127
  %151 = vmatpush.msra.mxu0 %v126
  %152 = vmatpush.msra.mxu0 %v125
  %153 = vmatpush.msra.mxu0 %v124
  %154 = vmatpush.msra.mxu0 %v123
  %155 = vmatmul.f32.gmra.mxu0 %v122
  %v156 = vpop.f32.mrf.mxu0
  %v157 = vadd.f32 0.0, %v156
  %158 = vdwg.mxu0
  %v159 = vadd.f32 %v119, %v157
  %160 = vst [vmem:[#allocation2] sm:$0xff] %v159
  // Predicated region
  $region30: #{mlp_forward.1} parent=0 // pred_check
    %p161 = pneg %p61
  $region31: #{mlp_forward.1} parent=0 // pred_check_branch
    %163 = sbr.rel (%p161) target = $region33
  $region32: #{mlp_forward.1} parent=0 // pred_region
    %v164 = vld [vmem:[#allocation2] sm:$0xff]
    %165 = vst [vmem:[%s5] sm:$0xff] %v164
  $region33: #{mlp_forward.1} parent=0 // pred_fallthru
    _
  // Predicated region
  $region34: #{mlp_forward.1} parent=0 // pred_check
    _
  $region35: #{mlp_forward.1} parent=0 // pred_check_branch
    %167 = sbr.rel (0) target = $region37
  $region36: #{mlp_forward.1} parent=0 // pred_region
    _
  $region37: #{mlp_forward.1} parent=0 // pred_fallthru
    _
  // Predicated region
  $region38: #{mlp_forward.1} parent=0 // pred_check
    _
  $region39: #{mlp_forward.1} parent=0 // pred_check_branch
    %169 = sbr.rel (0) target = $region41
  $region40: #{mlp_forward.1} parent=0 // pred_region
    _
  $region41: #{mlp_forward.1} parent=0 // pred_fallthru
    _

</llo_original>
